<compile_context>
chip_gen: v7x
topology: tpu7x:2x2x1
jax: 0.10.0
libtpu: 0.0.40
codegen_flags: <defaults>
</compile_context>

<pallas_src>
import jax
import jax.numpy as jnp
from jax.experimental import pallas as pl
from jax.experimental.pallas import tpu as pltpu


def _weighted_sq_sum_kernel(loss_ref, inp_ref, out_ref):
    # loss_ref / inp_ref: (P, TB) tile, batch on lanes.
    # out_ref: (1, 1, 1) f32 partial-sum accumulator for this core (resident
    # across the 'arbitrary' tile axis).
    t = pl.program_id(1)

    @pl.when(t == 0)
    def _():
        out_ref[...] = jnp.zeros_like(out_ref)

    w = inp_ref[...].astype(jnp.float32) * loss_ref[...].astype(jnp.float32)
    out_ref[...] = out_ref[...] + jnp.sum(w * w)


def optimal_value_loss(losses, date_idx, time_idx, pos_idx, inputs,
                       reduction="mean", tb_max=512, num_cores=2):
    """losses: (D, T, P, P) cached loss table; inputs: (B, P) probabilities."""
    assert reduction in ("mean", "sum"), "kernel supports 'mean'/'sum' reductions"
    D, T, P, P2 = losses.shape
    assert P == P2
    B, Pi = inputs.shape
    assert Pi == P

    # Wrapper-side gather: only B*P elements; the big table is left untouched
    # in its stored dtype (no full-table reshape/astype per call).
    value_loss = losses[date_idx, time_idx, pos_idx, :]          # (B, P)

    # Batch rides the lane axis: arrays become (P, B_pad), tiled as (P, TB).
    per_core = -(-B // num_cores)
    TB = min(tb_max, ((per_core + 127) // 128) * 128)            # multiple of 128
    n_tiles = -(-per_core // TB)
    B_pad = num_cores * n_tiles * TB

    loss_t = jnp.pad(value_loss.T, ((0, 0), (0, B_pad - B)))     # (P, B_pad)
    inp_t = jnp.pad(inputs.T, ((0, 0), (0, B_pad - B)))          # (P, B_pad)

    grid_spec = pltpu.PrefetchScalarGridSpec(
        num_scalar_prefetch=0,
        grid=(num_cores, n_tiles),
        in_specs=[
            pl.BlockSpec((P, TB), lambda c, t: (0, c * n_tiles + t)),
            pl.BlockSpec((P, TB), lambda c, t: (0, c * n_tiles + t)),
        ],
        out_specs=pl.BlockSpec((1, 1, 1), lambda c, t: (c, 0, 0)),
    )

    partials = pl.pallas_call(
        _weighted_sq_sum_kernel,
        out_shape=jax.ShapeDtypeStruct((num_cores, 1, 1), jnp.float32),
        grid_spec=grid_spec,
        compiler_params=pltpu.CompilerParams(
            dimension_semantics=("parallel", "arbitrary")),
    )(loss_t, inp_t)

    total = jnp.sum(partials)
    if reduction == "mean":
        total = total / jnp.asarray(B, jnp.float32)   # divide by true B, not grid size
    return total


def _reference(losses, date_idx, time_idx, pos_idx, inputs, reduction="mean"):
    value_loss = losses[date_idx, time_idx, pos_idx, :]
    w = inputs * value_loss
    per_sample = jnp.sum(w * w, axis=1)
    return per_sample.mean() if reduction == "mean" else per_sample.sum()


if __name__ == "__main__":
    # small, deterministic synthetic setup
    n_dates, n_steps, max_units, batch = 8, 16, 5, 16
    n_position = 2 * max_units + 1  # 11

    key = jax.random.PRNGKey(0)
    k_vals, k_inp, k_d, k_t, k_p = jax.random.split(key, 5)

    # synthetic cached-loss table, built the same way __init__ would:
    #   value_loss = row-max - values  (nonneg, per-row zero), then / std (ddof=1)
    values = jax.random.normal(k_vals, (n_dates, n_steps, n_position, n_position),
                               dtype=jnp.float32)
    losses = values.max(axis=-1, keepdims=True) - values
    losses = losses / jnp.std(losses, ddof=1)

    inputs = jax.nn.softmax(
        jax.random.normal(k_inp, (batch, n_position), dtype=jnp.float32), axis=-1)
    date_idx = jax.random.randint(k_d, (batch,), 0, n_dates, dtype=jnp.int32)
    time_idx = jax.random.randint(k_t, (batch,), 0, n_steps, dtype=jnp.int32)
    pos_idx = jax.random.randint(k_p, (batch,), 0, n_position, dtype=jnp.int32)

    out = optimal_value_loss(losses, date_idx, time_idx, pos_idx, inputs,
                             reduction="mean")
    out = jax.block_until_ready(out)

    ref = _reference(losses, date_idx, time_idx, pos_idx, inputs, reduction="mean")
    assert jnp.allclose(out, ref, rtol=1e-5, atol=1e-6), (out, ref)

    # also check 'sum' reduction path
    out_s = jax.block_until_ready(
        optimal_value_loss(losses, date_idx, time_idx, pos_idx, inputs,
                           reduction="sum"))
    ref_s = _reference(losses, date_idx, time_idx, pos_idx, inputs, reduction="sum")
    assert jnp.allclose(out_s, ref_s, rtol=1e-5, atol=1e-6), (out_s, ref_s)

    print("KERNEL_OK")
</pallas_src>

<mosaic_0001>
module attributes {stable_mosaic.version = 11 : i64} {
  func.func @_weighted_sq_sum_kernel(%arg0: i32, %arg1: i32, %arg2: memref<11x128xf32, #tpu.memory_space<vmem>>, %arg3: memref<11x128xf32, #tpu.memory_space<vmem>>, %arg4: memref<1x1x1xf32, #tpu.memory_space<vmem>>) attributes {dimension_semantics = [#tpu.dimension_semantics<parallel>, #tpu.dimension_semantics<arbitrary>], iteration_bounds = array<i64: 2, 1>, scalar_prefetch = 0 : i64, scratch_operands = 0 : i64, tpu.core_type = #tpu.core_type<tc>, window_params = [{transform_indices = @transform_0, window_bounds = array<i64: 11, 128>}, {transform_indices = @transform_1, window_bounds = array<i64: 11, 128>}, {transform_indices = @transform_2, window_bounds = array<i64: 1, 1, 1>}]} {
    %c0_i32 = arith.constant 0 : i32
    %0 = arith.cmpi eq, %arg1, %c0_i32 : i32
    %1 = arith.extui %0 : i1 to i32
    %c0_i32_0 = arith.constant 0 : i32
    %2 = arith.cmpi ne, %1, %c0_i32_0 : i32
    scf.if %2 {
      %cst_10 = arith.constant 0.000000e+00 : f32
      %15 = vector.broadcast %cst_10 : f32 to vector<1x1x1xf32>
      %c0_11 = arith.constant 0 : index
      %c0_12 = arith.constant 0 : index
      %c0_13 = arith.constant 0 : index
      %16 = vector.load %arg4[%c0_11, %c0_12, %c0_13] : memref<1x1x1xf32, #tpu.memory_space<vmem>>, vector<1x1x1xf32>
      tpu.vector_store %arg4[%c0_11, %c0_12, %c0_13], %15 {strides = array<i32>} : memref<1x1x1xf32, #tpu.memory_space<vmem>>, vector<1x1x1xf32>,
    } else {
    }
    %c0 = arith.constant 0 : index
    %c0_1 = arith.constant 0 : index
    %3 = vector.load %arg3[%c0, %c0_1] : memref<11x128xf32, #tpu.memory_space<vmem>>, vector<11x128xf32>
    %c0_2 = arith.constant 0 : index
    %c0_3 = arith.constant 0 : index
    %4 = vector.load %arg2[%c0_2, %c0_3] : memref<11x128xf32, #tpu.memory_space<vmem>>, vector<11x128xf32>
    %5 = arith.mulf %3, %4 : vector<11x128xf32>
    %c0_4 = arith.constant 0 : index
    %c0_5 = arith.constant 0 : index
    %c0_6 = arith.constant 0 : index
    %6 = vector.load %arg4[%c0_4, %c0_5, %c0_6] : memref<1x1x1xf32, #tpu.memory_space<vmem>>, vector<1x1x1xf32>
    %7 = arith.mulf %5, %5 : vector<11x128xf32>
    %8 = vector.shape_cast %7 : vector<11x128xf32> to vector<1x11x128xf32>
    %cst = arith.constant dense<0.000000e+00> : vector<1xf32>
    %9 = vector.multi_reduction <add>, %8, %cst [1, 2] : vector<1x11x128xf32> to vector<1xf32>
    %10 = vector.shape_cast %9 : vector<1xf32> to vector<1x1x1xf32>
    %11 = vector.extract %10[0, 0, 0] : f32 from vector<1x1x1xf32>
    %12 = vector.broadcast %11 : f32 to vector<1x1x1xf32>
    %13 = arith.addf %6, %12 : vector<1x1x1xf32>
    %c0_7 = arith.constant 0 : index
    %c0_8 = arith.constant 0 : index
    %c0_9 = arith.constant 0 : index
    %14 = vector.load %arg4[%c0_7, %c0_8, %c0_9] : memref<1x1x1xf32, #tpu.memory_space<vmem>>, vector<1x1x1xf32>
    tpu.vector_store %arg4[%c0_7, %c0_8, %c0_9], %13 {strides = array<i32>} : memref<1x1x1xf32, #tpu.memory_space<vmem>>, vector<1x1x1xf32>,
    return
  }
  func.func @transform_0(%arg0: i32, %arg1: i32) -> (i32, i32) {
    %c1_i32 = arith.constant 1 : i32
    %0 = arith.muli %arg0, %c1_i32 : i32
    %1 = arith.addi %0, %arg1 : i32
    %c0_i32 = arith.constant 0 : i32
    %c0_i32_0 = arith.constant 0 : i32
    return %c0_i32, %1 : i32, i32
  }
  func.func @transform_1(%arg0: i32, %arg1: i32) -> (i32, i32) {
    %c1_i32 = arith.constant 1 : i32
    %0 = arith.muli %arg0, %c1_i32 : i32
    %1 = arith.addi %0, %arg1 : i32
    %c0_i32 = arith.constant 0 : i32
    %c0_i32_0 = arith.constant 0 : i32
    return %c0_i32, %1 : i32, i32
  }
  func.func @transform_2(%arg0: i32, %arg1: i32) -> (i32, i32, i32) {
    %c0_i32 = arith.constant 0 : i32
    %c0_i32_0 = arith.constant 0 : i32
    %c0_i32_1 = arith.constant 0 : i32
    return %arg0, %c0_i32, %c0_i32_0 : i32, i32, i32
  }
}

</mosaic_0001>

<llo_original>
// kernel: tpu_custom_call.1
$region0: #{tpu_custom_call.1}
  #allocation0 [shape = 'u32[]', space=smem, size = 0x4, offset = 0x4, fixed_abs, tag = 'smem constant byte address 0x4 - core index']
  #allocation1 [shape = 'u32[144,128]{1,0:T(1,128)}', space=vmem, size = 0x12000, scoped, tag = 'internal scratch']
  %s0 = inlined_call_operand.hbm [shape: f32[11,256], index: 0, kind: input, shape index: {}]
  %s1 = inlined_call_operand.hbm [shape: f32[11,256], index: 1, kind: input, shape index: {}]
  %s2 = inlined_call_operand.vmem [shape: f32[2,1,1], index: 2, kind: output, shape index: {}]
  %s3 = sld [smem:[#allocation0]]
  $region53: #{tpu_custom_call.1} parent=0
    _
  %s5 = ssub.s32 1, %s3
  %s6 = scalar_select 0, %s5, %s3
  $region1: #{tpu_custom_call.1} parent=0
    #allocation2 [shape = 'u8[16384]{0}', space=vmem, size = 0x4000, scoped, tag = 'input window, operand 0']
    #allocation3 [shape = 's32[2]{0}', space=sflag, size = 0x8, scoped, tag = 'scoped memory for tpu_custom_call.1']
    #allocation4 [shape = 'u8[16384]{0}', space=vmem, size = 0x4000, scoped, tag = 'input window, operand 1']
    #allocation5 [shape = 's32[2]{0}', space=sflag, size = 0x8, scoped, tag = 'scoped memory for tpu_custom_call.1']
    %7 = vsyncpa [#allocation3], 0
    %s8 = scalar_lea.sflag [#allocation3], 1
    %9 = vsyncpa %s8, 0
    %10 = vsyncpa [#allocation5], 0
    %s11 = scalar_lea.sflag [#allocation5], 1
    %12 = vsyncpa %s11, 0
    loop: start=0, step=1, limit=4
    $region2: #{tpu_custom_call.1} parent=1 // loop_pre_header
      _
    $region3: #{tpu_custom_call.1} parent=1 // loop_header
      %s14 = sphi 0, %s18
      %p15 = scmp.ge.s32.totalorder %s14, 4
      %s21 = sphi 0, %s33
      %s22 = sphi 0, %s29
      %s23 = sphi 0, %s21
      %s24 = sphi 0, %s22
      %s25 = sphi 0, %s23
      %s26 = sphi 0, %s24
      %s38 = sphi 0, %s40
      %s41 = sphi 0, %s38
      %s42 = sphi 0, %s41
      %s58 = sphi 0, %s42
      %s66 = sphi 0, %s68
      %s69 = sphi 0, %s66
      %s70 = sphi 0, %s69
      %s86 = sphi 0, %s70
      %s92 = sphi 0, %s94
      %s95 = sphi 0, %s92
      %s96 = sphi 0, %s95
      %s112 = sphi 0, %s96
    $region4: #{tpu_custom_call.1} parent=1 // loop_header_branch
      %17 = sbr.rel (%p15) target = $region8
    $region5: #{tpu_custom_call.1} parent=1 // loop_body
      %s19 = ssub.s32 %s14, 1
      %s20 = ssub.s32 %s14, 2
      %s27 = sadd.s32 1, %s22
      %p28 = scmp.ge.s32.totalorder %s27, 1
      %s29 = scalar_select %p28, 0, %s27
      %s30 = sadd.s32 1, %s21
      %s31 = scalar_select %p28, %s30, %s21
      %p32 = scmp.ge.s32.totalorder %s31, 2
      %s33 = scalar_select %p32, 0, %s31
      %s34 = sadd.s32 %s21, %s22
      %s35 = sadd.s32 %s33, %s29
      %s36 = ssub.s32 %s34, %s35
      %p37 = scmp.eq.s32.totalorder %s36, 0
      %s39 = sadd.s32 %s38, 1
      %s40 = scalar_select %p37, %s38, %s39
      %p43 = pneg %p37
      %p44 = scmp.eq.s32.totalorder %s14, 1
      %p45 = por %p43, %p44
      %p46 = scmp.ne.s32.totalorder %s38, %s41
      %p47 = scmp.eq.s32.totalorder %s14, 0
      %p48 = por %p46, %p47
      %p49 = scmp.ne.s32.totalorder %s38, %s41
      %p50 = scmp.eq.s32.totalorder %s19, 1
      %p51 = por %p49, %p50
      %p52 = scmp.ne.s32.totalorder %s41, %s42
      %p53 = scmp.eq.s32.totalorder %s19, 0
      %p54 = por %p52, %p53
      %p55 = scmp.ne.s32.totalorder %s41, %s42
      %p56 = scmp.eq.s32.totalorder %s20, 1
      %p57 = por %p55, %p56
      %p59 = scmp.ne.s32.totalorder %s42, %s58
      %p60 = scmp.eq.s32.totalorder %s20, 0
      %p61 = por %p59, %p60
      %s62 = sadd.s32 %s21, %s22
      %s63 = sadd.s32 %s33, %s29
      %s64 = ssub.s32 %s62, %s63
      %p65 = scmp.eq.s32.totalorder %s64, 0
      %s67 = sadd.s32 %s66, 1
      %s68 = scalar_select %p65, %s66, %s67
      %p71 = pneg %p65
      %p72 = scmp.eq.s32.totalorder %s14, 1
      %p73 = por %p71, %p72
      %p74 = scmp.ne.s32.totalorder %s66, %s69
      %p75 = scmp.eq.s32.totalorder %s14, 0
      %p76 = por %p74, %p75
      %p77 = scmp.ne.s32.totalorder %s66, %s69
      %p78 = scmp.eq.s32.totalorder %s19, 1
      %p79 = por %p77, %p78
      %p80 = scmp.ne.s32.totalorder %s69, %s70
      %p81 = scmp.eq.s32.totalorder %s19, 0
      %p82 = por %p80, %p81
      %p83 = scmp.ne.s32.totalorder %s69, %s70
      %p84 = scmp.eq.s32.totalorder %s20, 1
      %p85 = por %p83, %p84
      %p87 = scmp.ne.s32.totalorder %s70, %s86
      %p88 = scmp.eq.s32.totalorder %s20, 0
      %p89 = por %p87, %p88
      %s90 = ssub.s32 %s21, %s33
      %p91 = scmp.eq.s32.totalorder %s90, 0
      %s93 = sadd.s32 %s92, 1
      %s94 = scalar_select %p91, %s92, %s93
      %p97 = pneg %p91
      %p98 = scmp.eq.s32.totalorder %s14, 1
      %p99 = por %p97, %p98
      %p100 = scmp.ne.s32.totalorder %s92, %s95
      %p101 = scmp.eq.s32.totalorder %s14, 0
      %p102 = por %p100, %p101
      %p103 = scmp.ne.s32.totalorder %s92, %s95
      %p104 = scmp.eq.s32.totalorder %s19, 1
      %p105 = por %p103, %p104
      %p106 = scmp.ne.s32.totalorder %s95, %s96
      %p107 = scmp.eq.s32.totalorder %s19, 0
      %p108 = por %p106, %p107
      %p109 = scmp.ne.s32.totalorder %s95, %s96
      %p110 = scmp.eq.s32.totalorder %s20, 1
      %p111 = por %p109, %p110
      %p113 = scmp.ne.s32.totalorder %s96, %s112
      %p114 = scmp.eq.s32.totalorder %s20, 0
      %p115 = por %p113, %p114
      %p116 = scmp.le.s32.totalorder 1, %s14
      %p117 = scmp.lt.s32.totalorder %s14, 3
      %p118 = pnand %p116, %p117
      %p119 = pneg %p118
      // Predicated region
      $region9: #{tpu_custom_call.1} parent=5 // pred_check
        _
      $region10: #{tpu_custom_call.1} parent=5 // pred_check_branch
        %121 = sbr.rel (%p118) target = $region12
      $region11: #{tpu_custom_call.1} parent=5 // pred_region
        %s122 = ssub.s32 %s14, 1
      $region12: #{tpu_custom_call.1} parent=5 // pred_fallthru
        _
      %p123 = scmp.lt.s32.totalorder %s14, 2
      // Predicated region
      $region13: #{tpu_custom_call.1} parent=5 // pred_check
        %p124 = pneg %p123
      $region14: #{tpu_custom_call.1} parent=5 // pred_check_branch
        %126 = sbr.rel (%p124) target = $region16
      $region15: #{tpu_custom_call.1} parent=5 // pred_region
        // Predicated region
        $region17: #{tpu_custom_call.1} parent=15 // pred_check
          %p127 = pneg %p48
        $region18: #{tpu_custom_call.1} parent=15 // pred_check_branch
          %129 = sbr.rel (%p127) target = $region20
        $region19: #{tpu_custom_call.1} parent=15 // pred_region
          %s130 = sand.u32 %s38, 1
          %s131 = scalar_lea.sflag [#allocation3], %s130
          %s132 = sand.u32 %s38, 1
          %s133 = smul.addr %s132, 16
          %s134 = scalar_lea.vmem [#allocation2], %s133
          %s135 = sadd.s32 %s21, %s22
          %s137 = ssub.s32 256, 256
          %138 = vsyncadd %s131, %s137
          %s139 = smul.addr %s135, 128
          %s140 = scalar_lea.hbm %s0, %s139
          %s141 = sshll.u32 %s134, 4
          %s142 = int_to_ptr.vmem [resolvable:$true] %s141
          %147 = dma.hbm_to_vmem [thread:$0]  %s140, 256, %s142, %s131, 256, 128, 8
        $region20: #{tpu_custom_call.1} parent=15 // pred_fallthru
          _
        // Predicated region
        $region21: #{tpu_custom_call.1} parent=15 // pred_check
          %p148 = pneg %p76
        $region22: #{tpu_custom_call.1} parent=15 // pred_check_branch
          %150 = sbr.rel (%p148) target = $region24
        $region23: #{tpu_custom_call.1} parent=15 // pred_region
          %s151 = sand.u32 %s66, 1
          %s152 = scalar_lea.sflag [#allocation5], %s151
          %s153 = sand.u32 %s66, 1
          %s154 = smul.addr %s153, 16
          %s155 = scalar_lea.vmem [#allocation4], %s154
          %s156 = sadd.s32 %s21, %s22
          %s158 = ssub.s32 256, 256
          %159 = vsyncadd %s152, %s158
          %s160 = smul.addr %s156, 128
          %s161 = scalar_lea.hbm %s1, %s160
          %s162 = sshll.u32 %s155, 4
          %s163 = int_to_ptr.vmem [resolvable:$true] %s162
          %168 = dma.hbm_to_vmem [thread:$0]  %s161, 256, %s163, %s152, 256, 128, 8
        $region24: #{tpu_custom_call.1} parent=15 // pred_fallthru
          _
      $region16: #{tpu_custom_call.1} parent=5 // pred_fallthru
        _
      %p169 = scmp.le.s32.totalorder 1, %s14
      %p170 = scmp.lt.s32.totalorder %s14, 3
      %p171 = pnand %p169, %p170
      %p172 = pneg %p171
      // Predicated region
      $region25: #{tpu_custom_call.1} parent=5 // pred_check
        _
      $region26: #{tpu_custom_call.1} parent=5 // pred_check_branch
        %174 = sbr.rel (%p171) target = $region28
      $region27: #{tpu_custom_call.1} parent=5 // pred_region
        %s175 = ssub.s32 %s14, 1
        %s176 = sand.u32 %s41, 1
        %s177 = scalar_lea.sflag [#allocation3], %s176
        %s178 = sand.u32 %s41, 1
        %s179 = smul.addr %s178, 16
        %s180 = scalar_lea.vmem [#allocation2], %s179
        // Predicated region
        $region29: #{tpu_custom_call.1} parent=27 // pred_check
          %p181 = pneg %p54
        $region30: #{tpu_custom_call.1} parent=27 // pred_check_branch
          %183 = sbr.rel (%p181) target = $region32
        $region31: #{tpu_custom_call.1} parent=27 // pred_region
          %184 = dma.done %s177, 256
        $region32: #{tpu_custom_call.1} parent=27 // pred_fallthru
          _
        %s185 = sand.u32 %s69, 1
        %s186 = scalar_lea.sflag [#allocation5], %s185
        %s187 = sand.u32 %s69, 1
        %s188 = smul.addr %s187, 16
        %s189 = scalar_lea.vmem [#allocation4], %s188
        // Predicated region
        $region33: #{tpu_custom_call.1} parent=27 // pred_check
          %p190 = pneg %p82
        $region34: #{tpu_custom_call.1} parent=27 // pred_check_branch
          %192 = sbr.rel (%p190) target = $region36
        $region35: #{tpu_custom_call.1} parent=27 // pred_region
          %193 = dma.done %s186, 256
        $region36: #{tpu_custom_call.1} parent=27 // pred_fallthru
          _
        %s194 = sand.u32 %s41, 1
        %s195 = scalar_lea.sflag [#allocation3], %s194
        %s196 = sand.u32 %s41, 1
        %s197 = smul.addr %s196, 16
        %s198 = scalar_lea.vmem [#allocation2], %s197
        %p199 = pneg %p54
        %p200 = pneg %p51
        %s201 = sand.u32 %s69, 1
        %s202 = scalar_lea.sflag [#allocation5], %s201
        %s203 = sand.u32 %s69, 1
        %s204 = smul.addr %s203, 16
        %s205 = scalar_lea.vmem [#allocation4], %s204
        %p206 = pneg %p82
        %p207 = pneg %p79
        %p208 = pneg %p108
        %p209 = pneg %p105
        %p210 = scmp.lt.s32.totalorder %s23, 1
        %s211 = scalar_select %p210, %s23, 1
        %s212 = scalar_lea.vmem %s2, %s211
        %s213 = sadd.s32 %s23, %s24
        %s214 = sadd.s32 %s23, %s24
        %p215 = scmp.lt.s32.totalorder %s23, 1
        %s216 = scalar_select %p215, %s23, 1
        %s217 = scalar_lea.vmem %s2, %s216
        %p218 = scmp.eq.s32.totalorder %s24, 0
        // Predicated region
        $region37: #{tpu_custom_call.1} parent=27 // pred_check
          %p219 = pneg %p218
        $region38: #{tpu_custom_call.1} parent=27 // pred_check_branch
          %221 = sbr.rel (%p219) target = $region40
        $region39: #{tpu_custom_call.1} parent=27 // pred_region
          %vm222 = vcmask 0
          %223 = vst.msk [vmem:[%s217] sm:$0x1] %vm222, 0.0
        $region40: #{tpu_custom_call.1} parent=27 // pred_fallthru
          _
        %v224 = vld [vmem:[%s189] sm:$0xff]
        %v225 = vld [vmem:[%s189 + $0x8] sm:$0x7]
        %v226 = vld [vmem:[%s180] sm:$0xff]
        %v227 = vld [vmem:[%s180 + $0x8] sm:$0x7]
        %v228 = vmul.f32 %v224, %v226
        %v229 = vmul.f32 %v225, %v227
        %v230 = vld [vmem:[%s217] sm:$0x1]
        %v231 = vmul.f32 %v228, %v228
        %v232 = vmul.f32 %v229, %v229
        %vm233 = vcmask 1042432
        %v234 = vsel %vm233, %v232, 0.0
        %v235 = vadd.f32 %v231, %v234
        %236 = vadd.xlane.f32.xlu0 %v235
        %v237 = vpop.xlane.xlu0 %236
        %v238 = vrot.slane %v237, 4
        %v239 = vadd.f32 %v237, %v238
        %v240 = vrot.slane %v239, 2
        %v241 = vadd.f32 %v239, %v240
        %v242 = vrot.slane %v241, 1
        %v243 = vadd.f32 %v241, %v242
        %s244 = vtos %v243
        %v245 = vstv %s244
        %v246 = vadd.f32 %v230, %v245
        %vm247 = vcmask 0
        %248 = vst.msk [vmem:[%s217] sm:$0x1] %vm247, %v246
        %p249 = scmp.lt.s32.totalorder %s23, 1
        %s250 = scalar_select %p249, %s23, 1
        %s251 = scalar_lea.vmem %s2, %s250
        // Predicated region
        $region41: #{tpu_custom_call.1} parent=27 // pred_check
          %p252 = pneg %p105
        $region42: #{tpu_custom_call.1} parent=27 // pred_check_branch
          %254 = sbr.rel (%p252) target = $region44
        $region43: #{tpu_custom_call.1} parent=27 // pred_region
          _
        $region44: #{tpu_custom_call.1} parent=27 // pred_fallthru
          _
      $region28: #{tpu_custom_call.1} parent=5 // pred_fallthru
        _
      %p255 = scmp.le.s32.totalorder 2, %s14
      // Predicated region
      $region45: #{tpu_custom_call.1} parent=5 // pred_check
        %p256 = pneg %p255
      $region46: #{tpu_custom_call.1} parent=5 // pred_check_branch
        %258 = sbr.rel (%p256) target = $region48
      $region47: #{tpu_custom_call.1} parent=5 // pred_region
        %s259 = ssub.s32 %s14, 2
        // Predicated region
        $region49: #{tpu_custom_call.1} parent=47 // pred_check
          %p260 = pneg %p111
        $region50: #{tpu_custom_call.1} parent=47 // pred_check_branch
          %262 = sbr.rel (%p260) target = $region52
        $region51: #{tpu_custom_call.1} parent=47 // pred_region
          %p263 = scmp.lt.s32.totalorder %s25, 1
          %s264 = scalar_select %p263, %s25, 1
          %s265 = scalar_lea.vmem %s2, %s264
        $region52: #{tpu_custom_call.1} parent=47 // pred_fallthru
          _
      $region48: #{tpu_custom_call.1} parent=5 // pred_fallthru
        _
    $region6: #{tpu_custom_call.1} parent=1 // loop_footer
      %s18 = sadd.s32 1, %s14
    $region7: #{tpu_custom_call.1} parent=1 // loop_footer_branch
      %13 = sbr.rel target = $region3
    $region8: #{tpu_custom_call.1} parent=1 // loop_exit
      _
    %266 = vsyncpa [#allocation3], 1
    %s267 = scalar_lea.sflag [#allocation3], 1
    %268 = vsyncpa %s267, 1
    %269 = vsyncpa [#allocation5], 1
    %s270 = scalar_lea.sflag [#allocation5], 1
    %271 = vsyncpa %s270, 1

</llo_original>
